<compile_context>
chip_gen: v6e
topology: v6e:2x2x1
jax: 0.10.0
libtpu: 0.0.40
codegen_flags: <defaults>
</compile_context>

<pallas_src>
import functools
import numpy as np
import jax
import jax.numpy as jnp
from jax.experimental import pallas as pl
from jax.experimental.pallas import tpu as pltpu

ALPHA = 0.25
GAMMA = 2.0  # baked in as the squared focal terms below


def _focal_kernel(anc_ref, cls_ref, reg_ref, ann_ref, annT_ref, out_ref, acc_ref,
                  *, num_anchors):
    s = pl.program_id(1)            # anchor-axis split (v7x megacore) index
    t = pl.program_id(2)            # anchor-tile index within the split
    n_t = pl.num_programs(2)

    @pl.when(t == 0)
    def _():
        acc_ref[...] = jnp.zeros_like(acc_ref)

    anc = anc_ref[...]                                   # (8, TA): cx,cy,w,h,x1,y1,x2,y2
    cls = jnp.clip(cls_ref[0], 1e-4, 1.0 - 1e-4)         # (C, TA)
    reg = reg_ref[0]                                     # (4, TA): rows dx,dy,dw,dh
    ann = ann_ref[0]                                     # (M, 5)
    annT = annT_ref[0]                                   # (8, M): x1,y1,x2,y2,label,0,0,0

    C, TA = cls.shape
    M = ann.shape[0]

    # ---- valid-anchor mask for the padded tail of the anchor axis ----
    lane = jax.lax.broadcasted_iota(jnp.int32, (1, TA), 1)
    g_idx = (s * n_t + t) * TA + lane
    avalid = (g_idx < num_anchors).astype(jnp.float32)   # (1, TA)

    a_ctr = anc[0:2, :]                                  # (2, TA): cx, cy
    a_wh = anc[2:4, :]                                   # (2, TA): w, h
    ax1 = anc[4:5, :]; ay1 = anc[5:6, :]
    ax2 = anc[6:7, :]; ay2 = anc[7:8, :]                 # (1, TA) pre-decoded corners

    bx1 = ann[:, 0:1]; by1 = ann[:, 1:2]
    bx2 = ann[:, 2:3]; by2 = ann[:, 3:4]
    blab = ann[:, 4:5]                                   # (M, 1)
    valid = blab != -1.0                                 # (M, 1)

    # ---- intersection / union, (M, TA) — sublane-dense since M is padded to 8k ----
    iw = jnp.maximum(jnp.minimum(ax2, bx2) - jnp.maximum(ax1, bx1), 0.0)
    ih = jnp.maximum(jnp.minimum(ay2, by2) - jnp.maximum(ay1, by1), 0.0)
    inter = iw * ih
    area_a = (ax2 - ax1) * (ay2 - ay1)                   # (1, TA)
    area_b = (bx2 - bx1) * (by2 - by1)                   # (M, 1)
    ua = jnp.maximum(area_a + area_b - inter, 1e-8)      # (M, TA)

    # Thresholds in multiply form (bit-stable, no EUP divides).
    pos_hit = jnp.where(valid & (inter >= 0.5 * ua), 1.0, 0.0)   # (M, TA)
    ge4_hit = jnp.where(valid & (inter >= 0.4 * ua), 1.0, 0.0)
    pos_f = jnp.max(pos_hit, axis=0, keepdims=True) * avalid     # (1, TA) positive anchors
    ge04 = jnp.max(ge4_hit, axis=0, keepdims=True)               # (1, TA) iou_max >= 0.4
    w_anc = pos_f + (1.0 - ge04) * avalid                # 1 unless in the [0.4, 0.5) ignore band
    num_pos = jnp.sum(pos_f)

    # Approx reciprocal only drives the argmax ranking (not the thresholds).
    rank = jnp.where(valid, inter * pl.reciprocal(ua, approx=True), -1.0)
    rank_max = jnp.max(rank, axis=0, keepdims=True)
    m_iota = jax.lax.broadcasted_iota(jnp.int32, (M, TA), 0)
    argmax = jnp.min(jnp.where(rank == rank_max, m_iota, M), axis=0, keepdims=True)
    onehot_m = (m_iota == argmax).astype(jnp.float32)    # (M, TA)

    # ---- assigned-annotation gather on the otherwise-idle MXU: (8, M) @ (M, TA) ----
    assigned = jnp.dot(annT, onehot_m, preferred_element_type=jnp.float32)  # (8, TA)
    g_lo = assigned[0:2, :]                              # (2, TA): x1, y1
    g_hi = assigned[2:4, :]                              # (2, TA): x2, y2
    lab_i = (assigned[4:5, :] + 0.5).astype(jnp.int32)   # round before cast (MXU-error robust)

    # ---- focal classification loss: dense all-negative + sparse positive fix-up ----
    log1m = jnp.log(1.0 - cls)                           # (C, TA), EUP
    neg_unit = (cls * cls) * log1m                       # (C, TA), = -[p^2 * (-log(1-p))]
    neg_row = jnp.sum(neg_unit, axis=0, keepdims=True)   # (1, TA)

    c_iota = jax.lax.broadcasted_iota(jnp.int32, (C, TA), 0)
    p_pos = jnp.sum(jnp.where(c_iota == lab_i, cls, 0.0), axis=0, keepdims=True)
    p_pos = jnp.clip(p_pos, 1e-4, 1.0 - 1e-4)            # NaN insurance; no-op for positives
    one_m_p = 1.0 - p_pos
    # replace the assigned-class negative term by the positive (target==1) term
    corr = (ALPHA * one_m_p * one_m_p * (-jnp.log(p_pos))
            + (1.0 - ALPHA) * (p_pos * p_pos) * jnp.log(one_m_p))
    cls_sum = jnp.sum((ALPHA - 1.0) * (w_anc * neg_row) + pos_f * corr)

    # ---- regression targets & smooth-L1 (stacked (2,TA)/(4,TA) form, positive-masked) ----
    g_wh = g_hi - g_lo
    g_ctr = g_lo + 0.5 * g_wh
    g_wh = jnp.maximum(g_wh, 1.0)
    t_xy = (g_ctr - a_ctr) / a_wh                        # rows dx, dy
    t_wh = jnp.log(g_wh / a_wh)                          # rows dw, dh

    def smooth_l1(d):
        return jnp.where(d <= 1.0 / 9.0, 4.5 * d * d, d - 0.5 / 9.0)

    reg_anchor = (jnp.sum(smooth_l1(jnp.abs(t_xy - reg[0:2, :])), axis=0, keepdims=True)
                  + jnp.sum(smooth_l1(jnp.abs(t_wh - reg[2:4, :])), axis=0, keepdims=True))
    reg_sum = jnp.sum(reg_anchor * pos_f)

    # ---- accumulate per-tile partials (row 0: cls_sum, row 1: reg_sum, row 2: num_pos) ----
    row_i = jax.lax.broadcasted_iota(jnp.int32, acc_ref.shape, 0)    # (8, 128)
    contrib = jnp.where(row_i == 0, cls_sum,
                        jnp.where(row_i == 1, reg_sum,
                                  jnp.where(row_i == 2, num_pos, 0.0)))
    acc_ref[...] = acc_ref[...] + contrib

    @pl.when(t == n_t - 1)
    def _():
        out_ref[0, 0] = acc_ref[...]   # raw partials; normalization happens in the wrapper


def _round_up(x, m):
    return ((x + m - 1) // m) * m


def _pick_anchor_tile(A, C, M, *, vmem_budget_bytes=20 << 20, max_tile=8192):
    """Largest lane-aligned anchor tile that fits the VMEM budget (generation-safe)."""
    # Rough per-anchor bytes: double-buffered (8 + C + 4)-row f32 input blocks plus
    # live (C, TA) / (M, TA) f32 temporaries and the (8/4/2, TA) assigned/target rows.
    per_anchor = 4 * (2 * (8 + C + 4) + 4 * C + 4 * M + 24)
    ta = vmem_budget_bytes // per_anchor
    ta = min(max_tile, int(ta), _round_up(A, 128))
    ta = max(128, (ta // 128) * 128)
    return int(ta)


def focal_loss_pallas(regressions, classifications, anchors, annotations):
    B, A, C = classifications.shape
    SPLIT = 2   # split the anchor axis into 2 parallel chunks → both v7x TCs busy even at B==1

    M0 = annotations.shape[1]
    M = max(8, _round_up(M0, 8))
    TA = _pick_anchor_tile(A, C, M)
    A_pad = _round_up(A, TA * SPLIT)
    n_t = (A_pad // TA) // SPLIT
    f32 = jnp.float32

    # ---------- XLA-side prep: lane-dense layout + hoisted anchor decode ----------
    # TODO(synk): on v5e, fuse this transpose into the upstream sigmoid producer (or feed
    # bf16 logits + in-kernel log-sigmoid) to avoid the extra HBM round-trip of cls.
    cls_t = jnp.transpose(classifications.astype(f32), (0, 2, 1))            # (B, C, A)
    cls_t = jnp.pad(cls_t, ((0, 0), (0, 0), (0, A_pad - A)))
    reg_perm = regressions.astype(f32)[:, :, jnp.array([1, 0, 3, 2])]        # -> dx,dy,dw,dh
    reg_t = jnp.transpose(reg_perm, (0, 2, 1))                               # (B, 4, A)
    reg_t = jnp.pad(reg_t, ((0, 0), (0, 0), (0, A_pad - A)))

    anchors_f = anchors.astype(f32)
    if A_pad != A:  # benign padding anchors (w=h=1 avoids div/log blow-ups; masked anyway)
        pad_rows = jnp.tile(jnp.array([[0.0, 0.0, 1.0, 1.0]], f32), (A_pad - A, 1))
        anchors_f = jnp.concatenate([anchors_f, pad_rows], axis=0)
    acx, acy = anchors_f[:, 0], anchors_f[:, 1]
    aw, ah = anchors_f[:, 2], anchors_f[:, 3]
    anchor_tab = jnp.stack(
        [acx, acy, aw, ah,
         acx - aw * 0.5, acy - ah * 0.5,
         acx + aw * 0.5, acy + ah * 0.5], axis=0)                            # (8, A_pad)

    annt = annotations.astype(f32)
    if M != M0:  # pad annotation count to a multiple of 8 with label=-1 (invalid) rows
        pad = jnp.concatenate(
            [jnp.zeros((B, M - M0, 4), f32),
             jnp.full((B, M - M0, 1), -1.0, f32)], axis=2)
        annt = jnp.concatenate([annt, pad], axis=1)                          # (B, M, 5)
    annt_t8 = jnp.concatenate(
        [jnp.transpose(annt, (0, 2, 1)), jnp.zeros((B, 3, M), f32)], axis=1)  # (B, 8, M)

    kernel = functools.partial(_focal_kernel, num_anchors=A)

    out = pl.pallas_call(
        kernel,
        out_shape=jax.ShapeDtypeStruct((B, SPLIT, 8, 128), f32),
        grid_spec=pltpu.PrefetchScalarGridSpec(
            num_scalar_prefetch=0,
            grid=(B, SPLIT, n_t),
            in_specs=[
                pl.BlockSpec((8, TA), lambda b, s, t: (0, s * n_t + t)),        # anchor table
                pl.BlockSpec((1, C, TA), lambda b, s, t: (b, 0, s * n_t + t)),  # classifications
                pl.BlockSpec((1, 4, TA), lambda b, s, t: (b, 0, s * n_t + t)),  # regressions
                pl.BlockSpec((1, M, 5), lambda b, s, t: (b, 0, 0)),             # annotations
                pl.BlockSpec((1, 8, M), lambda b, s, t: (b, 0, 0)),             # annotations^T
            ],
            out_specs=pl.BlockSpec((1, 1, 8, 128), lambda b, s, t: (b, s, 0, 0)),
            scratch_shapes=[pltpu.VMEM((8, 128), jnp.float32)],
        ),
        compiler_params=pltpu.CompilerParams(
            dimension_semantics=("parallel", "parallel", "arbitrary"),
            vmem_limit_bytes=40 * 1024 * 1024),
    )(anchor_tab, cls_t, reg_t, annt, annt_t8)

    # ---------- wrapper-side normalization (partials summed over the core split) ----------
    partials = jnp.sum(out[:, :, :3, 0], axis=1)                 # (B, 3)
    cls_sum, reg_sum, npos = partials[:, 0], partials[:, 1], partials[:, 2]
    cls_per_img = cls_sum / jnp.maximum(npos, 1.0)
    reg_per_img = jnp.where(npos > 0.0, reg_sum / jnp.maximum(npos * 4.0, 1.0), 0.0)
    # Matches torch: (stack(reg_losses).mean(), stack(cls_losses).mean())
    return jnp.mean(reg_per_img), jnp.mean(cls_per_img)


# ---------------- pure numpy reference (mirrors the PyTorch module) ----------------
def focal_loss_ref(regressions, classifications, anchors, annotations):
    regressions = np.asarray(regressions)
    classifications = np.asarray(classifications)
    anchors = np.asarray(anchors)
    annotations = np.asarray(annotations)
    B = classifications.shape[0]
    acx, acy, aw, ah = anchors[:, 0], anchors[:, 1], anchors[:, 2], anchors[:, 3]
    cls_losses, reg_losses = [], []
    for j in range(B):
        cls = np.clip(classifications[j], 1e-4, 1.0 - 1e-4)
        reg = regressions[j]
        ann = annotations[j]
        ann = ann[ann[:, 4] != -1]
        if ann.shape[0] == 0:
            fw = (1.0 - ALPHA) * cls ** GAMMA
            cls_losses.append((fw * (-np.log(1.0 - cls))).sum())
            reg_losses.append(np.float32(0.0))
            continue
        ax1 = acx - aw / 2; ay1 = acy - ah / 2
        ax2 = acx + aw / 2; ay2 = acy + ah / 2
        area = (ann[:, 2] - ann[:, 0]) * (ann[:, 3] - ann[:, 1])
        iw = np.minimum(ax2[:, None], ann[None, :, 2]) - np.maximum(ax1[:, None], ann[None, :, 0])
        ih = np.minimum(ay2[:, None], ann[None, :, 3]) - np.maximum(ay1[:, None], ann[None, :, 1])
        iw = np.clip(iw, 0, None); ih = np.clip(ih, 0, None)
        ua = np.clip(((ax2 - ax1) * (ay2 - ay1))[:, None] + area[None, :] - iw * ih, 1e-8, None)
        iou = iw * ih / ua
        iou_max = iou.max(axis=1); iou_arg = iou.argmax(axis=1)
        targets = -np.ones_like(cls)
        targets[iou_max < 0.4, :] = 0
        pos = iou_max >= 0.5
        npos = pos.sum()
        assigned = ann[iou_arg]
        targets[pos, :] = 0
        targets[pos, assigned[pos, 4].astype(np.int64)] = 1
        af = np.where(targets == 1.0, ALPHA, 1.0 - ALPHA)
        fw = np.where(targets == 1.0, 1.0 - cls, cls)
        fw = af * fw ** GAMMA
        bce = -(targets * np.log(cls) + (1.0 - targets) * np.log(1.0 - cls))
        cl = np.where(targets != -1.0, fw * bce, 0.0)
        cls_losses.append(cl.sum() / max(float(npos), 1.0))
        if npos > 0:
            asg = assigned[pos]
            awp, ahp, acxp, acyp = aw[pos], ah[pos], acx[pos], acy[pos]
            gw = asg[:, 2] - asg[:, 0]; gh = asg[:, 3] - asg[:, 1]
            gcx = asg[:, 0] + 0.5 * gw; gcy = asg[:, 1] + 0.5 * gh
            gw = np.clip(gw, 1, None); gh = np.clip(gh, 1, None)
            t = np.stack([(gcy - acyp) / ahp, (gcx - acxp) / awp,
                          np.log(gh / ahp), np.log(gw / awp)]).T
            d = np.abs(t - reg[pos])
            rl = np.where(d <= 1.0 / 9.0, 0.5 * 9.0 * d * d, d - 0.5 / 9.0)
            reg_losses.append(rl.mean())
        else:
            reg_losses.append(np.float32(0.0))
    return np.mean(reg_losses), np.mean(cls_losses)


if __name__ == "__main__":
    B, A, C, M = 3, 128, 8, 8           # image 2 has no valid annotations (all padding)
    key = jax.random.PRNGKey(0)
    k1, k2, k3, k4 = jax.random.split(key, 4)

    ctr = jax.random.uniform(k1, (A, 2), minval=10.0, maxval=90.0)
    wh = jax.random.uniform(k2, (A, 2), minval=8.0, maxval=32.0)
    anchors = jnp.concatenate([ctr, wh], axis=1).astype(jnp.float32)          # (A, 4) cx,cy,w,h

    classifications = jax.nn.sigmoid(jax.random.normal(k3, (B, A, C))).astype(jnp.float32)
    regressions = (0.1 * jax.random.normal(k4, (B, A, 4))).astype(jnp.float32)

    # Annotations built from a few anchors (so positives exist), padded with class = -1.
    anchors_np = np.asarray(anchors)
    ann_np = np.zeros((B, M, 5), dtype=np.float32)
    ann_np[:, :, 4] = -1.0
    sel = {0: [3, 17, 42], 1: [5, 64, 77, 90, 101]}                            # image 2 stays empty
    for b, idxs in sel.items():
        for i, ai in enumerate(idxs):
            cx, cy, w, h = anchors_np[ai]
            ann_np[b, i, :4] = [cx - w / 2.0, cy - h / 2.0, cx + w / 2.0, cy + h / 2.0]
            ann_np[b, i, 4] = float((ai + b) % C)
    annotations = jnp.asarray(ann_np)                                          # (B, M, 5)

    reg_loss, cls_loss = focal_loss_pallas(regressions, classifications, anchors, annotations)
    reg_loss, cls_loss = jax.block_until_ready((reg_loss, cls_loss))

    ref_reg, ref_cls = focal_loss_ref(regressions, classifications, anchors, annotations)
    np.testing.assert_allclose(np.asarray(reg_loss), ref_reg, rtol=1e-4, atol=1e-5)
    np.testing.assert_allclose(np.asarray(cls_loss), ref_cls, rtol=1e-4, atol=1e-5)

    print("KERNEL_OK")
</pallas_src>

<mosaic_0001>
module attributes {stable_mosaic.version = 11 : i64} {
  func.func @_focal_kernel(%arg0: i32, %arg1: i32, %arg2: i32, %arg3: memref<8x128xf32, #tpu.memory_space<vmem>>, %arg4: memref<1x8x128xf32, #tpu.memory_space<vmem>>, %arg5: memref<1x4x128xf32, #tpu.memory_space<vmem>>, %arg6: memref<1x8x5xf32, #tpu.memory_space<vmem>>, %arg7: memref<1x8x8xf32, #tpu.memory_space<vmem>>, %arg8: memref<1x1x8x128xf32, #tpu.memory_space<vmem>>, %arg9: memref<8x128xf32, #tpu.memory_space<vmem>>) attributes {dimension_semantics = [#tpu.dimension_semantics<parallel>, #tpu.dimension_semantics<parallel>, #tpu.dimension_semantics<arbitrary>], iteration_bounds = array<i64: 3, 2, 1>, scalar_prefetch = 0 : i64, scratch_operands = 1 : i64, tpu.core_type = #tpu.core_type<tc>, window_params = [{transform_indices = @transform_0, window_bounds = array<i64: 8, 128>}, {transform_indices = @transform_1, window_bounds = array<i64: 1, 8, 128>}, {transform_indices = @transform_2, window_bounds = array<i64: 1, 4, 128>}, {transform_indices = @transform_3, window_bounds = array<i64: 1, 8, 5>}, {transform_indices = @transform_4, window_bounds = array<i64: 1, 8, 8>}, {transform_indices = @transform_5, window_bounds = array<i64: 1, 1, 8, 128>}]} {
    %c0_i32 = arith.constant 0 : i32
    %0 = arith.cmpi eq, %arg2, %c0_i32 : i32
    %1 = arith.extui %0 : i1 to i32
    %c0_i32_0 = arith.constant 0 : i32
    %2 = arith.cmpi ne, %1, %c0_i32_0 : i32
    scf.if %2 {
      %cst_67 = arith.constant 0.000000e+00 : f32
      %229 = vector.broadcast %cst_67 : f32 to vector<8x128xf32>
      %c0_68 = arith.constant 0 : index
      %c0_69 = arith.constant 0 : index
      %230 = vector.load %arg9[%c0_68, %c0_69] : memref<8x128xf32, #tpu.memory_space<vmem>>, vector<8x128xf32>
      tpu.vector_store %arg9[%c0_68, %c0_69], %229 {strides = array<i32>} : memref<8x128xf32, #tpu.memory_space<vmem>>, vector<8x128xf32>,
    } else {
    }
    %c0 = arith.constant 0 : index
    %c0_1 = arith.constant 0 : index
    %3 = vector.load %arg3[%c0, %c0_1] : memref<8x128xf32, #tpu.memory_space<vmem>>, vector<8x128xf32>
    %c0_2 = arith.constant 0 : index
    %c0_3 = arith.constant 0 : index
    %c0_4 = arith.constant 0 : index
    %4 = vector.load %arg4[%c0_2, %c0_3, %c0_4] : memref<1x8x128xf32, #tpu.memory_space<vmem>>, vector<1x8x128xf32>
    %5 = vector.shape_cast %4 : vector<1x8x128xf32> to vector<8x128xf32>
    %cst = arith.constant 9.99999974E-5 : f32
    %cst_5 = arith.constant 0.999899983 : f32
    %6 = vector.broadcast %cst : f32 to vector<8x128xf32>
    %7 = arith.maximumf %6, %5 : vector<8x128xf32>
    %8 = vector.broadcast %cst_5 : f32 to vector<8x128xf32>
    %9 = arith.minimumf %8, %7 : vector<8x128xf32>
    %c0_6 = arith.constant 0 : index
    %c0_7 = arith.constant 0 : index
    %c0_8 = arith.constant 0 : index
    %10 = vector.load %arg5[%c0_6, %c0_7, %c0_8] : memref<1x4x128xf32, #tpu.memory_space<vmem>>, vector<1x4x128xf32>
    %11 = vector.shape_cast %10 : vector<1x4x128xf32> to vector<4x128xf32>
    %c0_9 = arith.constant 0 : index
    %c0_10 = arith.constant 0 : index
    %c0_11 = arith.constant 0 : index
    %12 = vector.load %arg6[%c0_9, %c0_10, %c0_11] : memref<1x8x5xf32, #tpu.memory_space<vmem>>, vector<1x8x5xf32>
    %13 = vector.shape_cast %12 : vector<1x8x5xf32> to vector<8x5xf32>
    %c0_12 = arith.constant 0 : index
    %c0_13 = arith.constant 0 : index
    %c0_14 = arith.constant 0 : index
    %14 = vector.load %arg7[%c0_12, %c0_13, %c0_14] : memref<1x8x8xf32, #tpu.memory_space<vmem>>, vector<1x8x8xf32>
    %15 = vector.shape_cast %14 : vector<1x8x8xf32> to vector<8x8xf32>
    %16 = tpu.iota {dimensions = array<i32: 1>} : vector<1x128xi32>
    %c1_i32 = arith.constant 1 : i32
    %17 = arith.muli %arg1, %c1_i32 : i32
    %18 = arith.addi %17, %arg2 : i32
    %c128_i32 = arith.constant 128 : i32
    %19 = arith.muli %18, %c128_i32 : i32
    %20 = vector.broadcast %19 : i32 to vector<1x128xi32>
    %21 = arith.addi %20, %16 : vector<1x128xi32>
    %c128_i32_15 = arith.constant 128 : i32
    %22 = vector.broadcast %c128_i32_15 : i32 to vector<1x128xi32>
    %23 = arith.cmpi slt, %21, %22 : vector<1x128xi32>
    %24 = arith.extui %23 : vector<1x128xi1> to vector<1x128xi32>
    %25 = arith.sitofp %24 : vector<1x128xi32> to vector<1x128xf32>
    %26 = vector.extract_strided_slice %3 {offsets = [0, 0], sizes = [2, 128], strides = [1, 1]} : vector<8x128xf32> to vector<2x128xf32>
    %27 = vector.extract_strided_slice %3 {offsets = [2, 0], sizes = [2, 128], strides = [1, 1]} : vector<8x128xf32> to vector<2x128xf32>
    %28 = vector.extract_strided_slice %3 {offsets = [4, 0], sizes = [1, 128], strides = [1, 1]} : vector<8x128xf32> to vector<1x128xf32>
    %29 = vector.extract_strided_slice %3 {offsets = [5, 0], sizes = [1, 128], strides = [1, 1]} : vector<8x128xf32> to vector<1x128xf32>
    %30 = vector.extract_strided_slice %3 {offsets = [6, 0], sizes = [1, 128], strides = [1, 1]} : vector<8x128xf32> to vector<1x128xf32>
    %31 = vector.extract_strided_slice %3 {offsets = [7, 0], sizes = [1, 128], strides = [1, 1]} : vector<8x128xf32> to vector<1x128xf32>
    %32 = vector.extract_strided_slice %13 {offsets = [0, 0], sizes = [8, 1], strides = [1, 1]} : vector<8x5xf32> to vector<8x1xf32>
    %33 = vector.extract_strided_slice %13 {offsets = [0, 1], sizes = [8, 1], strides = [1, 1]} : vector<8x5xf32> to vector<8x1xf32>
    %34 = vector.extract_strided_slice %13 {offsets = [0, 2], sizes = [8, 1], strides = [1, 1]} : vector<8x5xf32> to vector<8x1xf32>
    %35 = vector.extract_strided_slice %13 {offsets = [0, 3], sizes = [8, 1], strides = [1, 1]} : vector<8x5xf32> to vector<8x1xf32>
    %36 = vector.extract_strided_slice %13 {offsets = [0, 4], sizes = [8, 1], strides = [1, 1]} : vector<8x5xf32> to vector<8x1xf32>
    %cst_16 = arith.constant -1.000000e+00 : f32
    %37 = vector.broadcast %cst_16 : f32 to vector<8x1xf32>
    %38 = arith.cmpf one, %36, %37 : vector<8x1xf32>
    %39 = vector.broadcast %30 : vector<1x128xf32> to vector<8x128xf32>
    %40 = vector.broadcast %34 : vector<8x1xf32> to vector<8x128xf32>
    %41 = arith.minimumf %39, %40 : vector<8x128xf32>
    %42 = vector.broadcast %28 : vector<1x128xf32> to vector<8x128xf32>
    %43 = vector.broadcast %32 : vector<8x1xf32> to vector<8x128xf32>
    %44 = arith.maximumf %42, %43 : vector<8x128xf32>
    %45 = arith.subf %41, %44 : vector<8x128xf32>
    %cst_17 = arith.constant 0.000000e+00 : f32
    %46 = vector.broadcast %cst_17 : f32 to vector<8x128xf32>
    %47 = arith.maximumf %45, %46 : vector<8x128xf32>
    %48 = vector.broadcast %31 : vector<1x128xf32> to vector<8x128xf32>
    %49 = vector.broadcast %35 : vector<8x1xf32> to vector<8x128xf32>
    %50 = arith.minimumf %48, %49 : vector<8x128xf32>
    %51 = vector.broadcast %29 : vector<1x128xf32> to vector<8x128xf32>
    %52 = vector.broadcast %33 : vector<8x1xf32> to vector<8x128xf32>
    %53 = arith.maximumf %51, %52 : vector<8x128xf32>
    %54 = arith.subf %50, %53 : vector<8x128xf32>
    %cst_18 = arith.constant 0.000000e+00 : f32
    %55 = vector.broadcast %cst_18 : f32 to vector<8x128xf32>
    %56 = arith.maximumf %54, %55 : vector<8x128xf32>
    %57 = arith.mulf %47, %56 : vector<8x128xf32>
    %58 = arith.subf %30, %28 : vector<1x128xf32>
    %59 = arith.subf %31, %29 : vector<1x128xf32>
    %60 = arith.mulf %58, %59 : vector<1x128xf32>
    %61 = arith.subf %34, %32 : vector<8x1xf32>
    %62 = arith.subf %35, %33 : vector<8x1xf32>
    %63 = arith.mulf %61, %62 : vector<8x1xf32>
    %64 = vector.broadcast %60 : vector<1x128xf32> to vector<8x128xf32>
    %65 = vector.broadcast %63 : vector<8x1xf32> to vector<8x128xf32>
    %66 = arith.addf %64, %65 : vector<8x128xf32>
    %67 = arith.subf %66, %57 : vector<8x128xf32>
    %cst_19 = arith.constant 9.99999993E-9 : f32
    %68 = vector.broadcast %cst_19 : f32 to vector<8x128xf32>
    %69 = arith.maximumf %67, %68 : vector<8x128xf32>
    %cst_20 = arith.constant 5.000000e-01 : f32
    %70 = vector.broadcast %cst_20 : f32 to vector<8x128xf32>
    %71 = arith.mulf %70, %69 : vector<8x128xf32>
    %72 = arith.cmpf oge, %57, %71 : vector<8x128xf32>
    %73 = vector.broadcast %38 : vector<8x1xi1> to vector<8x128xi1>
    %74 = arith.andi %73, %72 : vector<8x128xi1>
    %cst_21 = arith.constant 1.000000e+00 : f32
    %cst_22 = arith.constant 0.000000e+00 : f32
    %75 = vector.broadcast %cst_21 : f32 to vector<8x128xf32>
    %76 = vector.broadcast %cst_22 : f32 to vector<8x128xf32>
    %77 = arith.select %74, %75, %76 : vector<8x128xi1>, vector<8x128xf32>
    %cst_23 = arith.constant 4.000000e-01 : f32
    %78 = vector.broadcast %cst_23 : f32 to vector<8x128xf32>
    %79 = arith.mulf %78, %69 : vector<8x128xf32>
    %80 = arith.cmpf oge, %57, %79 : vector<8x128xf32>
    %81 = vector.broadcast %38 : vector<8x1xi1> to vector<8x128xi1>
    %82 = arith.andi %81, %80 : vector<8x128xi1>
    %cst_24 = arith.constant 1.000000e+00 : f32
    %cst_25 = arith.constant 0.000000e+00 : f32
    %83 = vector.broadcast %cst_24 : f32 to vector<8x128xf32>
    %84 = vector.broadcast %cst_25 : f32 to vector<8x128xf32>
    %85 = arith.select %82, %83, %84 : vector<8x128xi1>, vector<8x128xf32>
    %cst_26 = arith.constant dense<0xFF800000> : vector<128xf32>
    %86 = vector.multi_reduction <maximumf>, %77, %cst_26 [0] : vector<8x128xf32> to vector<128xf32>
    %87 = vector.shape_cast %86 : vector<128xf32> to vector<1x128xf32>
    %88 = arith.mulf %87, %25 : vector<1x128xf32>
    %cst_27 = arith.constant dense<0xFF800000> : vector<128xf32>
    %89 = vector.multi_reduction <maximumf>, %85, %cst_27 [0] : vector<8x128xf32> to vector<128xf32>
    %90 = vector.shape_cast %89 : vector<128xf32> to vector<1x128xf32>
    %cst_28 = arith.constant 1.000000e+00 : f32
    %91 = vector.broadcast %cst_28 : f32 to vector<1x128xf32>
    %92 = arith.subf %91, %90 : vector<1x128xf32>
    %93 = arith.mulf %92, %25 : vector<1x128xf32>
    %94 = arith.addf %88, %93 : vector<1x128xf32>
    %95 = vector.shape_cast %88 : vector<1x128xf32> to vector<1x1x128xf32>
    %cst_29 = arith.constant dense<0.000000e+00> : vector<1xf32>
    %96 = vector.multi_reduction <add>, %95, %cst_29 [1, 2] : vector<1x1x128xf32> to vector<1xf32>
    %97 = vector.shape_cast %96 : vector<1xf32> to vector<1x1x1xf32>
    %98 = vector.extract %97[0, 0, 0] : f32 from vector<1x1x1xf32>
    %99 = tpu.reciprocal %69 {approx = true} : vector<8x128xf32> -> vector<8x128xf32>
    %100 = arith.mulf %57, %99 : vector<8x128xf32>
    %cst_30 = arith.constant -1.000000e+00 : f32
    %101 = vector.shape_cast %38 : vector<8x1xi1> to vector<8x1xi1>
    %102 = vector.broadcast %101 : vector<8x1xi1> to vector<8x128xi1>
    %103 = vector.broadcast %cst_30 : f32 to vector<8x128xf32>
    %104 = arith.select %102, %100, %103 : vector<8x128xi1>, vector<8x128xf32>
    %cst_31 = arith.constant dense<0xFF800000> : vector<128xf32>
    %105 = vector.multi_reduction <maximumf>, %104, %cst_31 [0] : vector<8x128xf32> to vector<128xf32>
    %106 = vector.shape_cast %105 : vector<128xf32> to vector<1x128xf32>
    %107 = tpu.iota {dimensions = array<i32: 0>} : vector<8x128xi32>
    %108 = vector.broadcast %106 : vector<1x128xf32> to vector<8x128xf32>
    %109 = arith.cmpf oeq, %104, %108 : vector<8x128xf32>
    %c8_i32 = arith.constant 8 : i32
    %110 = vector.broadcast %c8_i32 : i32 to vector<8x128xi32>
    %111 = arith.select %109, %107, %110 : vector<8x128xi1>, vector<8x128xi32>
    %cst_32 = arith.constant dense<2147483647> : vector<128xi32>
    %112 = vector.multi_reduction <minsi>, %111, %cst_32 [0] : vector<8x128xi32> to vector<128xi32>
    %113 = vector.shape_cast %112 : vector<128xi32> to vector<1x128xi32>
    %114 = vector.broadcast %113 : vector<1x128xi32> to vector<8x128xi32>
    %115 = arith.cmpi eq, %107, %114 : vector<8x128xi32>
    %116 = arith.extui %115 : vector<8x128xi1> to vector<8x128xi32>
    %117 = arith.sitofp %116 : vector<8x128xi32> to vector<8x128xf32>
    %cst_33 = arith.constant dense<0.000000e+00> : vector<8x128xf32>
    %118 = tpu.matmul %15, %117, %cst_33 {dimension_numbers = #tpu.dot_dimension_numbers<[1], [0], [0], [1], [0, 0, 1, 1], [], []>} : vector<8x8xf32>, vector<8x128xf32>, vector<8x128xf32> -> vector<8x128xf32>
    %119 = vector.extract_strided_slice %118 {offsets = [0, 0], sizes = [2, 128], strides = [1, 1]} : vector<8x128xf32> to vector<2x128xf32>
    %120 = vector.extract_strided_slice %118 {offsets = [2, 0], sizes = [2, 128], strides = [1, 1]} : vector<8x128xf32> to vector<2x128xf32>
    %121 = vector.extract_strided_slice %118 {offsets = [4, 0], sizes = [1, 128], strides = [1, 1]} : vector<8x128xf32> to vector<1x128xf32>
    %cst_34 = arith.constant 5.000000e-01 : f32
    %122 = vector.broadcast %cst_34 : f32 to vector<1x128xf32>
    %123 = arith.addf %121, %122 : vector<1x128xf32>
    %124 = arith.fptosi %123 : vector<1x128xf32> to vector<1x128xi32>
    %cst_35 = arith.constant 1.000000e+00 : f32
    %125 = vector.broadcast %cst_35 : f32 to vector<8x128xf32>
    %126 = arith.subf %125, %9 : vector<8x128xf32>
    %127 = math.log %126 : vector<8x128xf32>
    %128 = arith.mulf %9, %9 : vector<8x128xf32>
    %129 = arith.mulf %128, %127 : vector<8x128xf32>
    %cst_36 = arith.constant dense<0.000000e+00> : vector<128xf32>
    %130 = vector.multi_reduction <add>, %129, %cst_36 [0] : vector<8x128xf32> to vector<128xf32>
    %131 = vector.shape_cast %130 : vector<128xf32> to vector<1x128xf32>
    %132 = tpu.iota {dimensions = array<i32: 0>} : vector<8x128xi32>
    %133 = vector.broadcast %124 : vector<1x128xi32> to vector<8x128xi32>
    %134 = arith.cmpi eq, %132, %133 : vector<8x128xi32>
    %cst_37 = arith.constant 0.000000e+00 : f32
    %135 = vector.broadcast %cst_37 : f32 to vector<8x128xf32>
    %136 = arith.select %134, %9, %135 : vector<8x128xi1>, vector<8x128xf32>
    %cst_38 = arith.constant dense<0.000000e+00> : vector<128xf32>
    %137 = vector.multi_reduction <add>, %136, %cst_38 [0] : vector<8x128xf32> to vector<128xf32>
    %138 = vector.shape_cast %137 : vector<128xf32> to vector<1x128xf32>
    %cst_39 = arith.constant 9.99999974E-5 : f32
    %cst_40 = arith.constant 0.999899983 : f32
    %139 = vector.broadcast %cst_39 : f32 to vector<1x128xf32>
    %140 = arith.maximumf %139, %138 : vector<1x128xf32>
    %141 = vector.broadcast %cst_40 : f32 to vector<1x128xf32>
    %142 = arith.minimumf %141, %140 : vector<1x128xf32>
    %cst_41 = arith.constant 1.000000e+00 : f32
    %143 = vector.broadcast %cst_41 : f32 to vector<1x128xf32>
    %144 = arith.subf %143, %142 : vector<1x128xf32>
    %cst_42 = arith.constant 2.500000e-01 : f32
    %145 = vector.broadcast %cst_42 : f32 to vector<1x128xf32>
    %146 = arith.mulf %145, %144 : vector<1x128xf32>
    %147 = arith.mulf %146, %144 : vector<1x128xf32>
    %148 = math.log %142 : vector<1x128xf32>
    %cst_43 = arith.constant 0.000000e+00 : f32
    %149 = vector.broadcast %cst_43 : f32 to vector<1x128xf32>
    %150 = arith.subf %149, %148 : vector<1x128xf32>
    %151 = arith.mulf %147, %150 : vector<1x128xf32>
    %152 = arith.mulf %142, %142 : vector<1x128xf32>
    %cst_44 = arith.constant 7.500000e-01 : f32
    %153 = vector.broadcast %cst_44 : f32 to vector<1x128xf32>
    %154 = arith.mulf %153, %152 : vector<1x128xf32>
    %155 = math.log %144 : vector<1x128xf32>
    %156 = arith.mulf %154, %155 : vector<1x128xf32>
    %157 = arith.addf %151, %156 : vector<1x128xf32>
    %158 = arith.mulf %94, %131 : vector<1x128xf32>
    %cst_45 = arith.constant -7.500000e-01 : f32
    %159 = vector.broadcast %cst_45 : f32 to vector<1x128xf32>
    %160 = arith.mulf %159, %158 : vector<1x128xf32>
    %161 = arith.mulf %88, %157 : vector<1x128xf32>
    %162 = arith.addf %160, %161 : vector<1x128xf32>
    %163 = vector.shape_cast %162 : vector<1x128xf32> to vector<1x1x128xf32>
    %cst_46 = arith.constant dense<0.000000e+00> : vector<1xf32>
    %164 = vector.multi_reduction <add>, %163, %cst_46 [1, 2] : vector<1x1x128xf32> to vector<1xf32>
    %165 = vector.shape_cast %164 : vector<1xf32> to vector<1x1x1xf32>
    %166 = vector.extract %165[0, 0, 0] : f32 from vector<1x1x1xf32>
    %167 = arith.subf %120, %119 : vector<2x128xf32>
    %cst_47 = arith.constant 5.000000e-01 : f32
    %168 = vector.broadcast %cst_47 : f32 to vector<2x128xf32>
    %169 = arith.mulf %168, %167 : vector<2x128xf32>
    %170 = arith.addf %119, %169 : vector<2x128xf32>
    %cst_48 = arith.constant 1.000000e+00 : f32
    %171 = vector.broadcast %cst_48 : f32 to vector<2x128xf32>
    %172 = arith.maximumf %167, %171 : vector<2x128xf32>
    %173 = arith.subf %170, %26 : vector<2x128xf32>
    %174 = arith.divf %173, %27 : vector<2x128xf32>
    %175 = arith.divf %172, %27 : vector<2x128xf32>
    %176 = math.log %175 : vector<2x128xf32>
    %177 = vector.extract_strided_slice %11 {offsets = [0, 0], sizes = [2, 128], strides = [1, 1]} : vector<4x128xf32> to vector<2x128xf32>
    %178 = arith.subf %174, %177 : vector<2x128xf32>
    %179 = math.absf %178 : vector<2x128xf32>
    %cst_49 = arith.constant 0.111111112 : f32
    %180 = vector.broadcast %cst_49 : f32 to vector<2x128xf32>
    %181 = arith.cmpf ole, %179, %180 : vector<2x128xf32>
    %cst_50 = arith.constant 4.500000e+00 : f32
    %182 = vector.broadcast %cst_50 : f32 to vector<2x128xf32>
    %183 = arith.mulf %182, %179 : vector<2x128xf32>
    %184 = arith.mulf %183, %179 : vector<2x128xf32>
    %cst_51 = arith.constant 0.055555556 : f32
    %185 = vector.broadcast %cst_51 : f32 to vector<2x128xf32>
    %186 = arith.subf %179, %185 : vector<2x128xf32>
    %187 = arith.select %181, %184, %186 : vector<2x128xi1>, vector<2x128xf32>
    %cst_52 = arith.constant dense<0.000000e+00> : vector<128xf32>
    %188 = vector.multi_reduction <add>, %187, %cst_52 [0] : vector<2x128xf32> to vector<128xf32>
    %189 = vector.shape_cast %188 : vector<128xf32> to vector<1x128xf32>
    %190 = vector.extract_strided_slice %11 {offsets = [2, 0], sizes = [2, 128], strides = [1, 1]} : vector<4x128xf32> to vector<2x128xf32>
    %191 = arith.subf %176, %190 : vector<2x128xf32>
    %192 = math.absf %191 : vector<2x128xf32>
    %cst_53 = arith.constant 0.111111112 : f32
    %193 = vector.broadcast %cst_53 : f32 to vector<2x128xf32>
    %194 = arith.cmpf ole, %192, %193 : vector<2x128xf32>
    %cst_54 = arith.constant 4.500000e+00 : f32
    %195 = vector.broadcast %cst_54 : f32 to vector<2x128xf32>
    %196 = arith.mulf %195, %192 : vector<2x128xf32>
    %197 = arith.mulf %196, %192 : vector<2x128xf32>
    %cst_55 = arith.constant 0.055555556 : f32
    %198 = vector.broadcast %cst_55 : f32 to vector<2x128xf32>
    %199 = arith.subf %192, %198 : vector<2x128xf32>
    %200 = arith.select %194, %197, %199 : vector<2x128xi1>, vector<2x128xf32>
    %cst_56 = arith.constant dense<0.000000e+00> : vector<128xf32>
    %201 = vector.multi_reduction <add>, %200, %cst_56 [0] : vector<2x128xf32> to vector<128xf32>
    %202 = vector.shape_cast %201 : vector<128xf32> to vector<1x128xf32>
    %203 = arith.addf %189, %202 : vector<1x128xf32>
    %204 = arith.mulf %203, %88 : vector<1x128xf32>
    %205 = vector.shape_cast %204 : vector<1x128xf32> to vector<1x1x128xf32>
    %cst_57 = arith.constant dense<0.000000e+00> : vector<1xf32>
    %206 = vector.multi_reduction <add>, %205, %cst_57 [1, 2] : vector<1x1x128xf32> to vector<1xf32>
    %207 = vector.shape_cast %206 : vector<1xf32> to vector<1x1x1xf32>
    %208 = vector.extract %207[0, 0, 0] : f32 from vector<1x1x1xf32>
    %209 = tpu.iota {dimensions = array<i32: 0>} : vector<8x128xi32>
    %c0_i32_58 = arith.constant 0 : i32
    %210 = vector.broadcast %c0_i32_58 : i32 to vector<8x128xi32>
    %211 = arith.cmpi eq, %209, %210 : vector<8x128xi32>
    %c1_i32_59 = arith.constant 1 : i32
    %212 = vector.broadcast %c1_i32_59 : i32 to vector<8x128xi32>
    %213 = arith.cmpi eq, %209, %212 : vector<8x128xi32>
    %c2_i32 = arith.constant 2 : i32
    %214 = vector.broadcast %c2_i32 : i32 to vector<8x128xi32>
    %215 = arith.cmpi eq, %209, %214 : vector<8x128xi32>
    %cst_60 = arith.constant 0.000000e+00 : f32
    %216 = vector.broadcast %98 : f32 to vector<8x128xf32>
    %217 = vector.broadcast %cst_60 : f32 to vector<8x128xf32>
    %218 = arith.select %215, %216, %217 : vector<8x128xi1>, vector<8x128xf32>
    %219 = vector.broadcast %208 : f32 to vector<8x128xf32>
    %220 = arith.select %213, %219, %218 : vector<8x128xi1>, vector<8x128xf32>
    %221 = vector.broadcast %166 : f32 to vector<8x128xf32>
    %222 = arith.select %211, %221, %220 : vector<8x128xi1>, vector<8x128xf32>
    %c0_61 = arith.constant 0 : index
    %c0_62 = arith.constant 0 : index
    %223 = vector.load %arg9[%c0_61, %c0_62] : memref<8x128xf32, #tpu.memory_space<vmem>>, vector<8x128xf32>
    %224 = arith.addf %223, %222 : vector<8x128xf32>
    %c0_63 = arith.constant 0 : index
    %c0_64 = arith.constant 0 : index
    %225 = vector.load %arg9[%c0_63, %c0_64] : memref<8x128xf32, #tpu.memory_space<vmem>>, vector<8x128xf32>
    tpu.vector_store %arg9[%c0_63, %c0_64], %224 {strides = array<i32>} : memref<8x128xf32, #tpu.memory_space<vmem>>, vector<8x128xf32>,
    %c0_i32_65 = arith.constant 0 : i32
    %226 = arith.cmpi eq, %arg2, %c0_i32_65 : i32
    %227 = arith.extui %226 : i1 to i32
    %c0_i32_66 = arith.constant 0 : i32
    %228 = arith.cmpi ne, %227, %c0_i32_66 : i32
    scf.if %228 {
      %c0_67 = arith.constant 0 : index
      %c0_68 = arith.constant 0 : index
      %229 = vector.load %arg9[%c0_67, %c0_68] : memref<8x128xf32, #tpu.memory_space<vmem>>, vector<8x128xf32>
      %c0_69 = arith.constant 0 : index
      %c0_70 = arith.constant 0 : index
      %c0_71 = arith.constant 0 : index
      %c0_72 = arith.constant 0 : index
      %230 = vector.load %arg8[%c0_69, %c0_70, %c0_71, %c0_72] : memref<1x1x8x128xf32, #tpu.memory_space<vmem>>, vector<1x1x8x128xf32>
      %231 = vector.shape_cast %230 : vector<1x1x8x128xf32> to vector<8x128xf32>
      %232 = vector.shape_cast %229 : vector<8x128xf32> to vector<1x1x8x128xf32>
      tpu.vector_store %arg8[%c0_69, %c0_70, %c0_71, %c0_72], %232 {strides = array<i32>} : memref<1x1x8x128xf32, #tpu.memory_space<vmem>>, vector<1x1x8x128xf32>,
    } else {
    }
    return
  }
  func.func @transform_0(%arg0: i32, %arg1: i32, %arg2: i32) -> (i32, i32) {
    %c1_i32 = arith.constant 1 : i32
    %0 = arith.muli %arg1, %c1_i32 : i32
    %1 = arith.addi %0, %arg2 : i32
    %c0_i32 = arith.constant 0 : i32
    %c0_i32_0 = arith.constant 0 : i32
    return %c0_i32, %1 : i32, i32
  }
  func.func @transform_1(%arg0: i32, %arg1: i32, %arg2: i32) -> (i32, i32, i32) {
    %c1_i32 = arith.constant 1 : i32
    %0 = arith.muli %arg1, %c1_i32 : i32
    %1 = arith.addi %0, %arg2 : i32
    %c0_i32 = arith.constant 0 : i32
    %c0_i32_0 = arith.constant 0 : i32
    return %arg0, %c0_i32, %1 : i32, i32, i32
  }
  func.func @transform_2(%arg0: i32, %arg1: i32, %arg2: i32) -> (i32, i32, i32) {
    %c1_i32 = arith.constant 1 : i32
    %0 = arith.muli %arg1, %c1_i32 : i32
    %1 = arith.addi %0, %arg2 : i32
    %c0_i32 = arith.constant 0 : i32
    %c0_i32_0 = arith.constant 0 : i32
    return %arg0, %c0_i32, %1 : i32, i32, i32
  }
  func.func @transform_3(%arg0: i32, %arg1: i32, %arg2: i32) -> (i32, i32, i32) {
    %c0_i32 = arith.constant 0 : i32
    %c0_i32_0 = arith.constant 0 : i32
    %c0_i32_1 = arith.constant 0 : i32
    return %arg0, %c0_i32, %c0_i32_0 : i32, i32, i32
  }
  func.func @transform_4(%arg0: i32, %arg1: i32, %arg2: i32) -> (i32, i32, i32) {
    %c0_i32 = arith.constant 0 : i32
    %c0_i32_0 = arith.constant 0 : i32
    %c0_i32_1 = arith.constant 0 : i32
    return %arg0, %c0_i32, %c0_i32_0 : i32, i32, i32
  }
  func.func @transform_5(%arg0: i32, %arg1: i32, %arg2: i32) -> (i32, i32, i32, i32) {
    %c0_i32 = arith.constant 0 : i32
    %c0_i32_0 = arith.constant 0 : i32
    %c0_i32_1 = arith.constant 0 : i32
    return %arg0, %arg1, %c0_i32, %c0_i32_0 : i32, i32, i32, i32
  }
}

</mosaic_0001>

<llo_original>
// kernel: tpu_custom_call.1
$region0: #{tpu_custom_call.1}
  #allocation0 [shape = 'u32[]', space=smem, size = 0x4, offset = 0x4, fixed_abs, tag = 'smem constant byte address 0x4 - core index']
  #allocation1 [shape = 'u32[144,128]{1,0:T(1,128)}', space=vmem, size = 0x12000, scoped, tag = 'internal scratch']
  #allocation2 [shape = 'f32[8,128]{1,0:T(8,128)}', space=vmem, size = 0x1000, scoped, tag = 'scratch operand']
  %s0 = inlined_call_operand.hbm [shape: f32[8,256], index: 0, kind: input, shape index: {}]
  %s1 = inlined_call_operand.hbm [shape: f32[3,8,256], index: 1, kind: input, shape index: {}]
  %s2 = inlined_call_operand.vmem [shape: f32[3,4,256], index: 2, kind: input, shape index: {}]
  %s3 = inlined_call_operand.vmem [shape: f32[3,8,5], index: 3, kind: input, shape index: {}]
  %s4 = inlined_call_operand.vmem [shape: f32[3,8,8], index: 4, kind: input, shape index: {}]
  %s5 = inlined_call_operand.hbm [shape: f32[3,2,8,128], index: 5, kind: output, shape index: {}]
  %s6 = sld [smem:[#allocation0]]
  $region69: #{tpu_custom_call.1} parent=0
    _
  %s8 = ssub.s32 1, %s6
  %s9 = scalar_select 0, %s8, %s6
  $region1: #{tpu_custom_call.1} parent=0
    #allocation3 [shape = 'u8[8192]{0}', space=vmem, size = 0x2000, scoped, tag = 'input window, operand 0']
    #allocation4 [shape = 's32[2]{0}', space=sflag, size = 0x8, scoped, tag = 'scoped memory for tpu_custom_call.1']
    #allocation5 [shape = 's32[2]{0}', space=sflag, size = 0x8, scoped, tag = 'scoped memory for tpu_custom_call.1']
    #allocation6 [shape = 'u8[8192]{0}', space=vmem, size = 0x2000, scoped, tag = 'input window, operand 1']
    #allocation7 [shape = 's32[2]{0}', space=sflag, size = 0x8, scoped, tag = 'scoped memory for tpu_custom_call.1']
    #allocation8 [shape = 'u8[8192]{0}', space=vmem, size = 0x2000, scoped, tag = 'output window, operand 0']
    %10 = vsyncpa [#allocation4], 0
    %s11 = scalar_lea.sflag [#allocation4], 1
    %12 = vsyncpa %s11, 0
    %13 = vsyncpa [#allocation7], 0
    %s14 = scalar_lea.sflag [#allocation7], 1
    %15 = vsyncpa %s14, 0
    %16 = vsyncpa [#allocation5], 0
    %s17 = scalar_lea.sflag [#allocation5], 1
    %18 = vsyncpa %s17, 0
    loop: start=0, step=1, limit=8
    $region2: #{tpu_custom_call.1} parent=1 // loop_pre_header
      _
    $region3: #{tpu_custom_call.1} parent=1 // loop_header
      %s20 = sphi 0, %s24
      %p21 = scmp.ge.s32.totalorder %s20, 8
      %s27 = sphi 0, %s46
      %s28 = sphi 0, %s42
      %s29 = sphi 0, %s38
      %s30 = sphi 0, %s27
      %s31 = sphi 0, %s28
      %s32 = sphi 0, %s29
      %s33 = sphi 0, %s30
      %s34 = sphi 0, %s31
      %s35 = sphi 0, %s32
      %s51 = sphi 0, %s53
      %s54 = sphi 0, %s51
      %s55 = sphi 0, %s54
      %s71 = sphi 0, %s55
      %s81 = sphi 0, %s83
      %s84 = sphi 0, %s81
      %s85 = sphi 0, %s84
      %s101 = sphi 0, %s85
      %s111 = sphi 0, %s113
      %s114 = sphi 0, %s111
      %s115 = sphi 0, %s114
      %s131 = sphi 0, %s115
      %s137 = sphi 0, %s139
      %s140 = sphi 0, %s137
      %s141 = sphi 0, %s140
      %s157 = sphi 0, %s141
      %s163 = sphi 0, %s165
      %s166 = sphi 0, %s163
      %s167 = sphi 0, %s166
      %s183 = sphi 0, %s167
      %s191 = sphi 0, %s193
      %s194 = sphi 0, %s191
      %s195 = sphi 0, %s194
      %s211 = sphi 0, %s195
    $region4: #{tpu_custom_call.1} parent=1 // loop_header_branch
      %23 = sbr.rel (%p21) target = $region8
    $region5: #{tpu_custom_call.1} parent=1 // loop_body
      %s25 = ssub.s32 %s20, 1
      %s26 = ssub.s32 %s20, 2
      %s36 = sadd.s32 1, %s29
      %p37 = scmp.ge.s32.totalorder %s36, 1
      %s38 = scalar_select %p37, 0, %s36
      %s39 = sadd.s32 1, %s28
      %s40 = scalar_select %p37, %s39, %s28
      %p41 = scmp.ge.s32.totalorder %s40, 2
      %s42 = scalar_select %p41, 0, %s40
      %s43 = sadd.s32 1, %s27
      %s44 = scalar_select %p41, %s43, %s27
      %p45 = scmp.ge.s32.totalorder %s44, 3
      %s46 = scalar_select %p45, 0, %s44
      %s47 = sadd.s32 %s28, %s29
      %s48 = sadd.s32 %s42, %s38
      %s49 = ssub.s32 %s47, %s48
      %p50 = scmp.eq.s32.totalorder %s49, 0
      %s52 = sadd.s32 %s51, 1
      %s53 = scalar_select %p50, %s51, %s52
      %p56 = pneg %p50
      %p57 = scmp.eq.s32.totalorder %s20, 5
      %p58 = por %p56, %p57
      %p59 = scmp.ne.s32.totalorder %s51, %s54
      %p60 = scmp.eq.s32.totalorder %s20, 0
      %p61 = por %p59, %p60
      %p62 = scmp.ne.s32.totalorder %s51, %s54
      %p63 = scmp.eq.s32.totalorder %s25, 5
      %p64 = por %p62, %p63
      %p65 = scmp.ne.s32.totalorder %s54, %s55
      %p66 = scmp.eq.s32.totalorder %s25, 0
      %p67 = por %p65, %p66
      %p68 = scmp.ne.s32.totalorder %s54, %s55
      %p69 = scmp.eq.s32.totalorder %s26, 5
      %p70 = por %p68, %p69
      %p72 = scmp.ne.s32.totalorder %s55, %s71
      %p73 = scmp.eq.s32.totalorder %s26, 0
      %p74 = por %p72, %p73
      %s75 = sadd.s32 %s28, %s29
      %s76 = sadd.s32 %s42, %s38
      %s77 = ssub.s32 %s27, %s46
      %s78 = ssub.s32 %s75, %s76
      %s79 = sor.u32 %s77, %s78
      %p80 = scmp.eq.s32.totalorder %s79, 0
      %s82 = sadd.s32 %s81, 1
      %s83 = scalar_select %p80, %s81, %s82
      %p86 = pneg %p80
      %p87 = scmp.eq.s32.totalorder %s20, 5
      %p88 = por %p86, %p87
      %p89 = scmp.ne.s32.totalorder %s81, %s84
      %p90 = scmp.eq.s32.totalorder %s20, 0
      %p91 = por %p89, %p90
      %p92 = scmp.ne.s32.totalorder %s81, %s84
      %p93 = scmp.eq.s32.totalorder %s25, 5
      %p94 = por %p92, %p93
      %p95 = scmp.ne.s32.totalorder %s84, %s85
      %p96 = scmp.eq.s32.totalorder %s25, 0
      %p97 = por %p95, %p96
      %p98 = scmp.ne.s32.totalorder %s84, %s85
      %p99 = scmp.eq.s32.totalorder %s26, 5
      %p100 = por %p98, %p99
      %p102 = scmp.ne.s32.totalorder %s85, %s101
      %p103 = scmp.eq.s32.totalorder %s26, 0
      %p104 = por %p102, %p103
      %s105 = sadd.s32 %s28, %s29
      %s106 = sadd.s32 %s42, %s38
      %s107 = ssub.s32 %s27, %s46
      %s108 = ssub.s32 %s105, %s106
      %s109 = sor.u32 %s107, %s108
      %p110 = scmp.eq.s32.totalorder %s109, 0
      %s112 = sadd.s32 %s111, 1
      %s113 = scalar_select %p110, %s111, %s112
      %p116 = pneg %p110
      %p117 = scmp.eq.s32.totalorder %s20, 5
      %p118 = por %p116, %p117
      %p119 = scmp.ne.s32.totalorder %s111, %s114
      %p120 = scmp.eq.s32.totalorder %s20, 0
      %p121 = por %p119, %p120
      %p122 = scmp.ne.s32.totalorder %s111, %s114
      %p123 = scmp.eq.s32.totalorder %s25, 5
      %p124 = por %p122, %p123
      %p125 = scmp.ne.s32.totalorder %s114, %s115
      %p126 = scmp.eq.s32.totalorder %s25, 0
      %p127 = por %p125, %p126
      %p128 = scmp.ne.s32.totalorder %s114, %s115
      %p129 = scmp.eq.s32.totalorder %s26, 5
      %p130 = por %p128, %p129
      %p132 = scmp.ne.s32.totalorder %s115, %s131
      %p133 = scmp.eq.s32.totalorder %s26, 0
      %p134 = por %p132, %p133
      %s135 = ssub.s32 %s27, %s46
      %p136 = scmp.eq.s32.totalorder %s135, 0
      %s138 = sadd.s32 %s137, 1
      %s139 = scalar_select %p136, %s137, %s138
      %p142 = pneg %p136
      %p143 = scmp.eq.s32.totalorder %s20, 5
      %p144 = por %p142, %p143
      %p145 = scmp.ne.s32.totalorder %s137, %s140
      %p146 = scmp.eq.s32.totalorder %s20, 0
      %p147 = por %p145, %p146
      %p148 = scmp.ne.s32.totalorder %s137, %s140
      %p149 = scmp.eq.s32.totalorder %s25, 5
      %p150 = por %p148, %p149
      %p151 = scmp.ne.s32.totalorder %s140, %s141
      %p152 = scmp.eq.s32.totalorder %s25, 0
      %p153 = por %p151, %p152
      %p154 = scmp.ne.s32.totalorder %s140, %s141
      %p155 = scmp.eq.s32.totalorder %s26, 5
      %p156 = por %p154, %p155
      %p158 = scmp.ne.s32.totalorder %s141, %s157
      %p159 = scmp.eq.s32.totalorder %s26, 0
      %p160 = por %p158, %p159
      %s161 = ssub.s32 %s27, %s46
      %p162 = scmp.eq.s32.totalorder %s161, 0
      %s164 = sadd.s32 %s163, 1
      %s165 = scalar_select %p162, %s163, %s164
      %p168 = pneg %p162
      %p169 = scmp.eq.s32.totalorder %s20, 5
      %p170 = por %p168, %p169
      %p171 = scmp.ne.s32.totalorder %s163, %s166
      %p172 = scmp.eq.s32.totalorder %s20, 0
      %p173 = por %p171, %p172
      %p174 = scmp.ne.s32.totalorder %s163, %s166
      %p175 = scmp.eq.s32.totalorder %s25, 5
      %p176 = por %p174, %p175
      %p177 = scmp.ne.s32.totalorder %s166, %s167
      %p178 = scmp.eq.s32.totalorder %s25, 0
      %p179 = por %p177, %p178
      %p180 = scmp.ne.s32.totalorder %s166, %s167
      %p181 = scmp.eq.s32.totalorder %s26, 5
      %p182 = por %p180, %p181
      %p184 = scmp.ne.s32.totalorder %s167, %s183
      %p185 = scmp.eq.s32.totalorder %s26, 0
      %p186 = por %p184, %p185
      %s187 = ssub.s32 %s27, %s46
      %s188 = ssub.s32 %s28, %s42
      %s189 = sor.u32 %s187, %s188
      %p190 = scmp.eq.s32.totalorder %s189, 0
      %s192 = sadd.s32 %s191, 1
      %s193 = scalar_select %p190, %s191, %s192
      %p196 = pneg %p190
      %p197 = scmp.eq.s32.totalorder %s20, 5
      %p198 = por %p196, %p197
      %p199 = scmp.ne.s32.totalorder %s191, %s194
      %p200 = scmp.eq.s32.totalorder %s20, 0
      %p201 = por %p199, %p200
      %p202 = scmp.ne.s32.totalorder %s191, %s194
      %p203 = scmp.eq.s32.totalorder %s25, 5
      %p204 = por %p202, %p203
      %p205 = scmp.ne.s32.totalorder %s194, %s195
      %p206 = scmp.eq.s32.totalorder %s25, 0
      %p207 = por %p205, %p206
      %p208 = scmp.ne.s32.totalorder %s194, %s195
      %p209 = scmp.eq.s32.totalorder %s26, 5
      %p210 = por %p208, %p209
      %p212 = scmp.ne.s32.totalorder %s195, %s211
      %p213 = scmp.eq.s32.totalorder %s26, 0
      %p214 = por %p212, %p213
      %p215 = scmp.le.s32.totalorder 1, %s20
      %p216 = scmp.lt.s32.totalorder %s20, 7
      %p217 = pnand %p215, %p216
      %p218 = pneg %p217
      // Predicated region
      $region9: #{tpu_custom_call.1} parent=5 // pred_check
        _
      $region10: #{tpu_custom_call.1} parent=5 // pred_check_branch
        %220 = sbr.rel (%p217) target = $region12
      $region11: #{tpu_custom_call.1} parent=5 // pred_region
        %s221 = ssub.s32 %s20, 1
      $region12: #{tpu_custom_call.1} parent=5 // pred_fallthru
        _
      %p222 = scmp.lt.s32.totalorder %s20, 6
      // Predicated region
      $region13: #{tpu_custom_call.1} parent=5 // pred_check
        %p223 = pneg %p222
      $region14: #{tpu_custom_call.1} parent=5 // pred_check_branch
        %225 = sbr.rel (%p223) target = $region16
      $region15: #{tpu_custom_call.1} parent=5 // pred_region
        // Predicated region
        $region17: #{tpu_custom_call.1} parent=15 // pred_check
          %p226 = pneg %p61
        $region18: #{tpu_custom_call.1} parent=15 // pred_check_branch
          %228 = sbr.rel (%p226) target = $region20
        $region19: #{tpu_custom_call.1} parent=15 // pred_region
          %s229 = sand.u32 %s51, 1
          %s230 = scalar_lea.sflag [#allocation4], %s229
          %s231 = sand.u32 %s51, 1
          %s232 = smul.addr %s231, 8
          %s233 = scalar_lea.vmem [#allocation3], %s232
          %s234 = sadd.s32 %s28, %s29
          %s236 = ssub.s32 128, 128
          %237 = vsyncadd %s230, %s236
          %s238 = smul.addr %s234, 128
          %s239 = scalar_lea.hbm %s0, %s238
          %s241 = sshll.u32 %s233, 4
          %s242 = int_to_ptr.vmem [resolvable:$true] %s241
          %244 = dma.hbm_to_vmem [thread:$0]  %s239, 128, %s242, %s230
        $region20: #{tpu_custom_call.1} parent=15 // pred_fallthru
          _
        // Predicated region
        $region21: #{tpu_custom_call.1} parent=15 // pred_check
          %p245 = pneg %p91
        $region22: #{tpu_custom_call.1} parent=15 // pred_check_branch
          %247 = sbr.rel (%p245) target = $region24
        $region23: #{tpu_custom_call.1} parent=15 // pred_region
          %s248 = sand.u32 %s81, 1
          %s249 = scalar_lea.sflag [#allocation7], %s248
          %s250 = sand.u32 %s81, 1
          %s251 = smul.addr %s250, 8
          %s252 = scalar_lea.vmem [#allocation6], %s251
          %s253 = sadd.s32 %s28, %s29
          %s255 = ssub.s32 128, 128
          %256 = vsyncadd %s249, %s255
          %s257 = smul.addr %s27, 2
          %s258 = sadd.s32 %s253, %s257
          %s259 = smul.addr %s258, 128
          %s260 = scalar_lea.hbm %s1, %s259
          %s262 = sshll.u32 %s252, 4
          %s263 = int_to_ptr.vmem [resolvable:$true] %s262
          %265 = dma.hbm_to_vmem [thread:$0]  %s260, 128, %s263, %s249
        $region24: #{tpu_custom_call.1} parent=15 // pred_fallthru
          _
        // Predicated region
        $region25: #{tpu_custom_call.1} parent=15 // pred_check
          %p266 = pneg %p121
        $region26: #{tpu_custom_call.1} parent=15 // pred_check_branch
          %268 = sbr.rel (%p266) target = $region28
        $region27: #{tpu_custom_call.1} parent=15 // pred_region
          %s269 = sadd.s32 %s28, %s29
          %p270 = scmp.lt.s32.totalorder %s27, 2
          %s271 = scalar_select %p270, %s27, 2
          %p272 = scmp.lt.s32.totalorder %s269, 1
          %s273 = scalar_select %p272, %s269, 1
          %s274 = smul.addr %s271, 2
          %s275 = sadd.s32 %s273, %s274
          %s276 = smul.addr %s275, 4
          %s277 = scalar_lea.vmem %s2, %s276
          %s278 = sadd.s32 %s28, %s29
        $region28: #{tpu_custom_call.1} parent=15 // pred_fallthru
          _
        // Predicated region
        $region29: #{tpu_custom_call.1} parent=15 // pred_check
          %p279 = pneg %p147
        $region30: #{tpu_custom_call.1} parent=15 // pred_check_branch
          %281 = sbr.rel (%p279) target = $region32
        $region31: #{tpu_custom_call.1} parent=15 // pred_region
          %p282 = scmp.lt.s32.totalorder %s27, 2
          %s283 = scalar_select %p282, %s27, 2
          %s284 = smul.addr %s283, 8
          %s285 = scalar_lea.vmem %s3, %s284
        $region32: #{tpu_custom_call.1} parent=15 // pred_fallthru
          _
        // Predicated region
        $region33: #{tpu_custom_call.1} parent=15 // pred_check
          %p286 = pneg %p173
        $region34: #{tpu_custom_call.1} parent=15 // pred_check_branch
          %288 = sbr.rel (%p286) target = $region36
        $region35: #{tpu_custom_call.1} parent=15 // pred_region
          %p289 = scmp.lt.s32.totalorder %s27, 2
          %s290 = scalar_select %p289, %s27, 2
          %s291 = smul.addr %s290, 8
          %s292 = scalar_lea.vmem %s4, %s291
        $region36: #{tpu_custom_call.1} parent=15 // pred_fallthru
          _
      $region16: #{tpu_custom_call.1} parent=5 // pred_fallthru
        _
      %p293 = scmp.le.s32.totalorder 1, %s20
      %p294 = scmp.lt.s32.totalorder %s20, 7
      %p295 = pnand %p293, %p294
      %p296 = pneg %p295
      // Predicated region
      $region37: #{tpu_custom_call.1} parent=5 // pred_check
        _
      $region38: #{tpu_custom_call.1} parent=5 // pred_check_branch
        %298 = sbr.rel (%p295) target = $region40
      $region39: #{tpu_custom_call.1} parent=5 // pred_region
        %s299 = ssub.s32 %s20, 1
        %s300 = sand.u32 %s54, 1
        %s301 = scalar_lea.sflag [#allocation4], %s300
        %s302 = sand.u32 %s54, 1
        %s303 = smul.addr %s302, 8
        %s304 = scalar_lea.vmem [#allocation3], %s303
        // Predicated region
        $region41: #{tpu_custom_call.1} parent=39 // pred_check
          %p305 = pneg %p67
        $region42: #{tpu_custom_call.1} parent=39 // pred_check_branch
          %307 = sbr.rel (%p305) target = $region44
        $region43: #{tpu_custom_call.1} parent=39 // pred_region
          %308 = dma.done %s301, 128
        $region44: #{tpu_custom_call.1} parent=39 // pred_fallthru
          _
        %s309 = sand.u32 %s84, 1
        %s310 = scalar_lea.sflag [#allocation7], %s309
        %s311 = sand.u32 %s84, 1
        %s312 = smul.addr %s311, 8
        %s313 = scalar_lea.vmem [#allocation6], %s312
        // Predicated region
        $region45: #{tpu_custom_call.1} parent=39 // pred_check
          %p314 = pneg %p97
        $region46: #{tpu_custom_call.1} parent=39 // pred_check_branch
          %316 = sbr.rel (%p314) target = $region48
        $region47: #{tpu_custom_call.1} parent=39 // pred_region
          %317 = dma.done %s310, 128
        $region48: #{tpu_custom_call.1} parent=39 // pred_fallthru
          _
        %s318 = sand.u32 %s54, 1
        %s319 = scalar_lea.sflag [#allocation4], %s318
        %s320 = sand.u32 %s54, 1
        %s321 = smul.addr %s320, 8
        %s322 = scalar_lea.vmem [#allocation3], %s321
        %p323 = pneg %p67
        %p324 = pneg %p64
        %s325 = sand.u32 %s84, 1
        %s326 = scalar_lea.sflag [#allocation7], %s325
        %s327 = sand.u32 %s84, 1
        %s328 = smul.addr %s327, 8
        %s329 = scalar_lea.vmem [#allocation6], %s328
        %p330 = pneg %p97
        %p331 = pneg %p94
        %s332 = sadd.s32 %s31, %s32
        %p333 = scmp.lt.s32.totalorder %s30, 2
        %s334 = scalar_select %p333, %s30, 2
        %p335 = scmp.lt.s32.totalorder %s332, 1
        %s336 = scalar_select %p335, %s332, 1
        %s337 = smul.addr %s334, 2
        %s338 = sadd.s32 %s336, %s337
        %s339 = smul.addr %s338, 4
        %s340 = scalar_lea.vmem %s2, %s339
        %p341 = pneg %p127
        %p342 = pneg %p124
        %p343 = scmp.lt.s32.totalorder %s30, 2
        %s344 = scalar_select %p343, %s30, 2
        %s345 = smul.addr %s344, 8
        %s346 = scalar_lea.vmem %s3, %s345
        %p347 = pneg %p153
        %p348 = pneg %p150
        %p349 = scmp.lt.s32.totalorder %s30, 2
        %s350 = scalar_select %p349, %s30, 2
        %s351 = smul.addr %s350, 8
        %s352 = scalar_lea.vmem %s4, %s351
        %p353 = pneg %p179
        %p354 = pneg %p176
        %p355 = pneg %p207
        %p356 = pneg %p204
        %s357 = sand.u32 %s194, 1
        %s358 = scalar_lea.sflag [#allocation5], %s357
        %s359 = sand.u32 %s194, 1
        %s360 = smul.addr %s359, 8
        %s361 = scalar_lea.vmem [#allocation8], %s360
        %s362 = sadd.s32 %s31, %s32
        %s363 = sadd.s32 %s31, %s32
        %s364 = sadd.s32 %s31, %s32
        %p365 = scmp.lt.s32.totalorder %s30, 2
        %s366 = scalar_select %p365, %s30, 2
        %p367 = scmp.lt.s32.totalorder %s364, 1
        %s368 = scalar_select %p367, %s364, 1
        %s369 = smul.addr %s366, 2
        %s370 = sadd.s32 %s368, %s369
        %s371 = smul.addr %s370, 4
        %s372 = scalar_lea.vmem %s2, %s371
        %s373 = sadd.s32 %s31, %s32
        %p374 = scmp.lt.s32.totalorder %s30, 2
        %s375 = scalar_select %p374, %s30, 2
        %s376 = smul.addr %s375, 8
        %s377 = scalar_lea.vmem %s3, %s376
        %p378 = scmp.lt.s32.totalorder %s30, 2
        %s379 = scalar_select %p378, %s30, 2
        %s380 = smul.addr %s379, 8
        %s381 = scalar_lea.vmem %s4, %s380
        %p382 = scmp.eq.s32.totalorder %s32, 0
        // Predicated region
        $region49: #{tpu_custom_call.1} parent=39 // pred_check
          %p383 = pneg %p382
        $region50: #{tpu_custom_call.1} parent=39 // pred_check_branch
          %385 = sbr.rel (%p383) target = $region52
        $region51: #{tpu_custom_call.1} parent=39 // pred_region
          %386 = vst [vmem:[#allocation2] sm:$0xff] 0.0
        $region52: #{tpu_custom_call.1} parent=39 // pred_fallthru
          _
        %v387 = vld [vmem:[%s304] sm:$0xff]
        %v388 = vld [vmem:[%s313] sm:$0xff]
        %v389 = vmax.f32 %v388, 0.0001
        %v390 = vmin.f32 %v389, 0.9999
        %v391 = vld [vmem:[%s372] sm:$0xf]
        %v392 = vld [vmem:[%s377] sm:$0xff]
        %v393 = vld [vmem:[%s381] sm:$0xff]
        %v394 = vlaneseq
        %v395 = vand.u32 %v394, 127
        %s396 = sadd.s32 %s31, %s32
        %s397 = smul.u32 %s396, 128
        %v398 = vstv %s397
        %v399 = vadd.s32 %v398, %v395
        %vm400 = vcmp.lt.s32.totalorder %v399, 128
        %v401 = vsel %vm400, 1, 0
        %v402 = vcvt.s32.f32 %v401
        %vm403 = vcmp.ne.f32.partialorder %v392, -1.0
        %v404 = vlaneseq
        %v405 = vshrl.u32 %v404, 7
        %v406 = vsub.s32 6, %v405
        %v407 = vrot.slane %v387, %v406
        %409 = vset.pattern.permute.xlu0 2
        %410 = vperm.xlu0 %409, %v392
        %v411 = vpop.permute.xlu0 %410
        %v413 = vmin.f32 %v407, %v411
        %v414 = vlaneseq
        %v415 = vshrl.u32 %v414, 7
        %v416 = vsub.s32 4, %v415
        %v417 = vrot.slane %v387, %v416
        %418 = vset.pattern.permute.xlu0 0
        %419 = vperm.xlu0 %418, %v392
        %v420 = vpop.permute.xlu0 %419
        %v422 = vmax.f32 %v417, %v420
        %v423 = vsub.f32 %v413, %v422
        %v424 = vmax.f32 %v423, 0.0
        %v425 = vlaneseq
        %v426 = vshrl.u32 %v425, 7
        %v427 = vsub.s32 7, %v426
        %v428 = vrot.slane %v387, %v427
        %429 = vset.pattern.permute.xlu0 3
        %430 = vperm.xlu0 %429, %v392
        %v431 = vpop.permute.xlu0 %430
        %v433 = vmin.f32 %v428, %v431
        %v434 = vlaneseq
        %v435 = vshrl.u32 %v434, 7
        %v436 = vsub.s32 5, %v435
        %v437 = vrot.slane %v387, %v436
        %438 = vset.pattern.permute.xlu0 1
        %439 = vperm.xlu0 %438, %v392
        %v440 = vpop.permute.xlu0 %439
        %v442 = vmax.f32 %v437, %v440
        %v443 = vsub.f32 %v433, %v442
        %v444 = vmax.f32 %v443, 0.0
        %v445 = vmul.f32 %v424, %v444
        %v447 = vrot.slane %v387, 6
        %v449 = vsub.f32 %v387, %v447
        %v451 = vrot.slane %v449, 1
        %v453 = vmul.f32 %v449, %v451
        %454 = vrot.lane.b32.xlu0 %v392, 2
        %v455 = vpop.permute.xlu0 %454
        %v457 = vsub.f32 %v392, %v455
        %459 = vrot.lane.b32.xlu0 %v457, 127
        %v460 = vpop.permute.xlu0 %459
        %v462 = vmul.f32 %v457, %v460
        %v463 = vlaneseq
        %v464 = vshrl.u32 %v463, 7
        %v465 = vsub.s32 6, %v464
        %v466 = vrot.slane %v453, %v465
        %468 = vset.pattern.permute.xlu0 2
        %469 = vperm.xlu0 %468, %v462
        %v470 = vpop.permute.xlu0 %469
        %v472 = vadd.f32 %v466, %v470
        %v473 = vsub.f32 %v472, %v445
        %v474 = vmax.f32 %v473, 1e-08
        %v475 = vmul.f32 %v474, 0.5
        %vm476 = vcmp.ge.f32.partialorder %v445, %v475
        %v477 = vsel %vm403, 1, 0
        %478 = vset.pattern.permute.xlu0 4
        %479 = vperm.xlu0 %478, %v477
        %v480 = vpop.permute.xlu0 %479
        %vm481 = vcmp.eq.s32.totalorder %v480, 1
        %vm482 = vmand %vm481, %vm476
        %v483 = vsel %vm482, 1.0, 0.0
        %v484 = vmul.f32 %v474, 0.4
        %vm485 = vcmp.ge.f32.partialorder %v445, %v484
        %vm486 = vmand %vm481, %vm485
        %v487 = vsel %vm486, 1.0, 0.0
        %v488 = vrot.slane %v483, 4
        %v489 = vmax.f32 %v483, %v488
        %v490 = vrot.slane %v489, 2
        %v491 = vmax.f32 %v489, %v490
        %v492 = vrot.slane %v491, 1
        %v493 = vmax.f32 %v491, %v492
        %v494 = vmul.f32 %v493, %v402
        %v495 = vrot.slane %v487, 4
        %v496 = vmax.f32 %v487, %v495
        %v497 = vrot.slane %v496, 2
        %v498 = vmax.f32 %v496, %v497
        %v499 = vrot.slane %v498, 1
        %v500 = vmax.f32 %v498, %v499
        %v501 = vsub.f32 1.0, %v500
        %v502 = vmul.f32 %v501, %v402
        %v503 = vadd.f32 %v494, %v502
        %vm504 = vcmask 1040384
        %v505 = vsel %vm504, %v494, 0.0
        %506 = vadd.xlane.f32.xlu0 %v505
        %v507 = vpop.xlane.xlu0 %506
        %v508 = vrot.slane %v507, 4
        %v509 = vadd.f32 %v507, %v508
        %v510 = vrot.slane %v509, 2
        %v511 = vadd.f32 %v509, %v510
        %v512 = vrot.slane %v511, 1
        %v513 = vadd.f32 %v511, %v512
        %s514 = vtos %v513
        %v515 = vrcp.pop %v474
        %v516 = vmul.f32 %v445, %v515
        %v517 = vsel %vm481, %v516, -1.0
        %v518 = vrot.slane %v517, 4
        %v519 = vmax.f32 %v517, %v518
        %v520 = vrot.slane %v519, 2
        %v521 = vmax.f32 %v519, %v520
        %v522 = vrot.slane %v521, 1
        %v523 = vmax.f32 %v521, %v522
        %v524 = vlaneseq
        %v525 = vshrl.u32 %v524, 7
        %vm526 = vcmp.eq.f32.partialorder %v517, %v523
        %v527 = vsel %vm526, %v525, 8
        %v528 = vrot.slane %v527, 4
        %vm529 = vcmp.lt.s32.totalorder %v527, %v528
        %v530 = vsel %vm529, %v527, %v528
        %v531 = vrot.slane %v530, 2
        %vm532 = vcmp.lt.s32.totalorder %v530, %v531
        %v533 = vsel %vm532, %v530, %v531
        %v534 = vrot.slane %v533, 1
        %vm535 = vcmp.lt.s32.totalorder %v533, %v534
        %v536 = vsel %vm535, %v533, %v534
        %vm537 = vcmp.eq.s32.totalorder %v525, %v536
        %v538 = vsel %vm537, 1, 0
        %v539 = vcvt.s32.f32 %v538
        %vm540 = vcmask 64512
        %v542 = vsel %vm540, %v393, 0
        %544 = vmatprep.subr.mxu0 0.0
        %545 = vmatpush1.msra.mxu0 0.0
        %546 = vmatprep.subr.mxu0 0.0
        %547 = vmatpush1.msra.mxu0 0.0
        %548 = vmatprep.subr.mxu0 0.0
        %549 = vmatpush1.msra.mxu0 0.0
        %550 = vmatprep.subr.mxu0 0.0
        %551 = vmatpush1.msra.mxu0 0.0
        %552 = vmatprep.subr.mxu0 0.0
        %553 = vmatpush1.msra.mxu0 0.0
        %554 = vmatprep.subr.mxu0 0.0
        %555 = vmatpush1.msra.mxu0 0.0
        %556 = vmatprep.subr.mxu0 0.0
        %557 = vmatpush1.msra.mxu0 0.0
        %558 = vmatprep.subr.mxu0 0.0
        %559 = vmatpush1.msra.mxu0 0.0
        %560 = vmatprep.subr.mxu0 0.0
        %561 = vmatpush1.msra.mxu0 0.0
        %562 = vmatprep.subr.mxu0 0.0
        %563 = vmatpush1.msra.mxu0 0.0
        %564 = vmatprep.subr.mxu0 0.0
        %565 = vmatpush1.msra.mxu0 0.0
        %566 = vmatprep.subr.mxu0 0.0
        %567 = vmatpush1.msra.mxu0 0.0
        %568 = vmatprep.subr.mxu0 0.0
        %569 = vmatpush1.msra.mxu0 0.0
        %570 = vmatprep.subr.mxu0 0.0
        %571 = vmatpush1.msra.mxu0 0.0
        %572 = vmatprep.subr.mxu0 0.0
        %573 = vmatpush1.msra.mxu0 0.0
        %574 = vmatprep.subr.mxu0 0.0
        %575 = vmatpush1.msra.mxu0 %v539
        %576 = vmatprep.subr.mxu0 0.0
        %577 = vmatpush2.msra.mxu0 0.0
        %578 = vmatprep.subr.mxu0 0.0
        %579 = vmatpush2.msra.mxu0 0.0
        %580 = vmatprep.subr.mxu0 0.0
        %581 = vmatpush2.msra.mxu0 0.0
        %582 = vmatprep.subr.mxu0 0.0
        %583 = vmatpush2.msra.mxu0 0.0
        %584 = vmatprep.subr.mxu0 0.0
        %585 = vmatpush2.msra.mxu0 0.0
        %586 = vmatprep.subr.mxu0 0.0
        %587 = vmatpush2.msra.mxu0 0.0
        %588 = vmatprep.subr.mxu0 0.0
        %589 = vmatpush2.msra.mxu0 0.0
        %590 = vmatprep.subr.mxu0 0.0
        %591 = vmatpush2.msra.mxu0 0.0
        %592 = vmatprep.subr.mxu0 0.0
        %593 = vmatpush2.msra.mxu0 0.0
        %594 = vmatprep.subr.mxu0 0.0
        %595 = vmatpush2.msra.mxu0 0.0
        %596 = vmatprep.subr.mxu0 0.0
        %597 = vmatpush2.msra.mxu0 0.0
        %598 = vmatprep.subr.mxu0 0.0
        %599 = vmatpush2.msra.mxu0 0.0
        %600 = vmatprep.subr.mxu0 0.0
        %601 = vmatpush2.msra.mxu0 0.0
        %602 = vmatprep.subr.mxu0 0.0
        %603 = vmatpush2.msra.mxu0 0.0
        %604 = vmatprep.subr.mxu0 0.0
        %605 = vmatpush2.msra.mxu0 0.0
        %606 = vmatprep.subr.mxu0 0.0
        %607 = vmatpush2.msra.mxu0 0.0
        %608 = vmatprep.mubr.f32.mxu0 0.0
        %609 = vmatmul.mubr.f32.gmra.mxu0 %v542
        %v610 = vpop.f32.mrf.mxu0
        %v611 = vadd.f32 0.0, %v610
        %v612 = vpop.f32.mrf.mxu0
        %613 = vdwg.mxu0
        %v614 = vadd.f32 %v611, 0.5
        %v615 = vcvt.f32.s32.to.zero.pseudo %v614
        %v616 = vsub.f32 1.0, %v390
        %v617 = vlog2.pop %v616
        %v618 = vmul.f32 %v617, 0.6931472
        %v619 = vmul.f32 %v390, %v390
        %v620 = vmul.f32 %v619, %v618
        %v621 = vrot.slane %v620, 4
        %v622 = vadd.f32 %v620, %v621
        %v623 = vrot.slane %v622, 2
        %v624 = vadd.f32 %v622, %v623
        %v625 = vrot.slane %v624, 1
        %v626 = vadd.f32 %v624, %v625
        %v627 = vlaneseq
        %v628 = vshrl.u32 %v627, 7
        %v629 = vsub.s32 4, %v628
        %v630 = vrot.slane %v615, %v629
        %vm631 = vcmp.eq.s32.totalorder %v525, %v630
        %v632 = vsel %vm631, %v390, 0.0
        %v633 = vrot.slane %v632, 4
        %v634 = vadd.f32 %v632, %v633
        %v635 = vrot.slane %v634, 2
        %v636 = vadd.f32 %v634, %v635
        %v637 = vrot.slane %v636, 1
        %v638 = vadd.f32 %v636, %v637
        %v639 = vmax.f32 %v638, 0.0001
        %v640 = vmin.f32 %v639, 0.9999
        %v641 = vsub.f32 1.0, %v640
        %v642 = vmul.f32 %v641, 0.25
        %v643 = vmul.f32 %v642, %v641
        %v644 = vlog2.pop %v640
        %v645 = vmul.f32 %v644, 0.6931472
        %v646 = vsub.f32 0.0, %v645
        %v647 = vmul.f32 %v643, %v646
        %v648 = vmul.f32 %v640, %v640
        %v649 = vmul.f32 %v648, 0.75
        %v650 = vlog2.pop %v641
        %v651 = vmul.f32 %v650, 0.6931472
        %v652 = vmul.f32 %v649, %v651
        %v653 = vadd.f32 %v647, %v652
        %v654 = vmul.f32 %v503, %v626
        %v655 = vmul.f32 %v654, -0.75
        %v656 = vmul.f32 %v494, %v653
        %v657 = vadd.f32 %v655, %v656
        %v658 = vsel %vm504, %v657, 0.0
        %659 = vadd.xlane.f32.xlu0 %v658
        %v660 = vpop.xlane.xlu0 %659
        %v661 = vrot.slane %v660, 4
        %v662 = vadd.f32 %v660, %v661
        %v663 = vrot.slane %v662, 2
        %v664 = vadd.f32 %v662, %v663
        %v665 = vrot.slane %v664, 1
        %v666 = vadd.f32 %v664, %v665
        %s667 = vtos %v666
        %v669 = vrot.slane %v611, 6
        %v671 = vsub.f32 %v611, %v669
        %v672 = vmul.f32 %v671, 0.5
        %v674 = vrot.slane %v672, 2
        %v676 = vadd.f32 %v611, %v674
        %v677 = vmax.f32 %v671, 1.0
        %v678 = vsub.f32 %v676, %v387
        %v679 = vrot.slane %v387, 2
        %v681 = vrcp.pop %v679
        %v682 = vmul.f32 %v678, %v681
        %v683 = vrcp.pop %v387
        %v684 = vmul.f32 %v677, %v683
        %v685 = vlog2.pop %v684
        %v686 = vmul.f32 %v685, 0.6931472
        %v687 = vsub.f32 %v682, %v391
        %v688 = vand.u32 2147483647, %v687
        %vm689 = vcmp.le.f32.partialorder %v688, 0.11111111
        %v690 = vmul.f32 %v688, 4.5
        %v691 = vmul.f32 %v690, %v688
        %v692 = vsub.f32 %v688, 0.055555556
        %v693 = vsel %vm689, %v691, %v692
        %vm694 = vcmask 1041408
        %v695 = vsel %vm694, %v693, 0.0
        %v696 = vrot.slane %v695, 4
        %v697 = vadd.f32 %v695, %v696
        %v698 = vrot.slane %v697, 2
        %v699 = vadd.f32 %v697, %v698
        %v700 = vrot.slane %v699, 1
        %v701 = vadd.f32 %v699, %v700
        %v702 = vsub.f32 %v686, %v391
        %v703 = vand.u32 2147483647, %v702
        %vm704 = vcmp.le.f32.partialorder %v703, 0.11111111
        %v705 = vmul.f32 %v703, 4.5
        %v706 = vmul.f32 %v705, %v703
        %v707 = vsub.f32 %v703, 0.055555556
        %v708 = vsel %vm704, %v706, %v707
        %v710 = vrot.slane %v708, 2
        %v712 = vsel %vm694, %v710, 0.0
        %v713 = vrot.slane %v712, 4
        %v714 = vadd.f32 %v712, %v713
        %v715 = vrot.slane %v714, 2
        %v716 = vadd.f32 %v714, %v715
        %v717 = vrot.slane %v716, 1
        %v718 = vadd.f32 %v716, %v717
        %v719 = vadd.f32 %v701, %v718
        %v720 = vmul.f32 %v719, %v494
        %v721 = vsel %vm504, %v720, 0.0
        %722 = vadd.xlane.f32.xlu0 %v721
        %v723 = vpop.xlane.xlu0 %722
        %v724 = vrot.slane %v723, 4
        %v725 = vadd.f32 %v723, %v724
        %v726 = vrot.slane %v725, 2
        %v727 = vadd.f32 %v725, %v726
        %v728 = vrot.slane %v727, 1
        %v729 = vadd.f32 %v727, %v728
        %s730 = vtos %v729
        %vm731 = vcmp.eq.s32.totalorder %v525, 0
        %vm732 = vcmp.eq.s32.totalorder %v525, 1
        %vm733 = vcmp.eq.s32.totalorder %v525, 2
        %v734 = vstv %s514
        %v735 = vsel %vm733, %v734, 0.0
        %v736 = vstv %s730
        %v737 = vsel %vm732, %v736, %v735
        %v738 = vstv %s667
        %v739 = vsel %vm731, %v738, %v737
        %v740 = vld [vmem:[#allocation2] sm:$0xff]
        %v741 = vadd.f32 %v740, %v739
        %742 = vst [vmem:[#allocation2] sm:$0xff] %v741
        // Predicated region
        $region53: #{tpu_custom_call.1} parent=39 // pred_check
          %p743 = pneg %p382
        $region54: #{tpu_custom_call.1} parent=39 // pred_check_branch
          %745 = sbr.rel (%p743) target = $region56
        $region55: #{tpu_custom_call.1} parent=39 // pred_region
          %v746 = vld [vmem:[#allocation2] sm:$0xff]
          %747 = vst [vmem:[%s361] sm:$0xff] %v746
        $region56: #{tpu_custom_call.1} parent=39 // pred_fallthru
          _
        %s748 = sand.u32 %s194, 1
        %s749 = scalar_lea.sflag [#allocation5], %s748
        %s750 = sand.u32 %s194, 1
        %s751 = smul.addr %s750, 8
        %s752 = scalar_lea.vmem [#allocation8], %s751
        // Predicated region
        $region57: #{tpu_custom_call.1} parent=39 // pred_check
          %p753 = pneg %p204
        $region58: #{tpu_custom_call.1} parent=39 // pred_check_branch
          %755 = sbr.rel (%p753) target = $region60
        $region59: #{tpu_custom_call.1} parent=39 // pred_region
          %s757 = ssub.s32 128, 128
          %758 = vsyncadd %s749, %s757
          %s759 = smul.addr %s30, 2
          %s760 = sadd.s32 %s31, %s759
          %s761 = smul.addr %s760, 128
          %s762 = scalar_lea.hbm %s5, %s761
          %s764 = sshll.u32 %s752, 4
          %s765 = int_to_ptr.vmem [resolvable:$true] %s764
          %767 = dma.vmem_to_hbm [thread:$0]  %s765, 128, %s762, %s749
        $region60: #{tpu_custom_call.1} parent=39 // pred_fallthru
          _
      $region40: #{tpu_custom_call.1} parent=5 // pred_fallthru
        _
      %p768 = scmp.le.s32.totalorder 2, %s20
      // Predicated region
      $region61: #{tpu_custom_call.1} parent=5 // pred_check
        %p769 = pneg %p768
      $region62: #{tpu_custom_call.1} parent=5 // pred_check_branch
        %771 = sbr.rel (%p769) target = $region64
      $region63: #{tpu_custom_call.1} parent=5 // pred_region
        %s772 = ssub.s32 %s20, 2
        // Predicated region
        $region65: #{tpu_custom_call.1} parent=63 // pred_check
          %p773 = pneg %p210
        $region66: #{tpu_custom_call.1} parent=63 // pred_check_branch
          %775 = sbr.rel (%p773) target = $region68
        $region67: #{tpu_custom_call.1} parent=63 // pred_region
          %s776 = sand.u32 %s195, 1
          %s777 = scalar_lea.sflag [#allocation5], %s776
          %s778 = sand.u32 %s195, 1
          %s779 = smul.addr %s778, 8
          %s780 = scalar_lea.vmem [#allocation8], %s779
          %781 = dma.done %s777, 128
        $region68: #{tpu_custom_call.1} parent=63 // pred_fallthru
          _
      $region64: #{tpu_custom_call.1} parent=5 // pred_fallthru
        _
    $region6: #{tpu_custom_call.1} parent=1 // loop_footer
      %s24 = sadd.s32 1, %s20
    $region7: #{tpu_custom_call.1} parent=1 // loop_footer_branch
      %19 = sbr.rel target = $region3
    $region8: #{tpu_custom_call.1} parent=1 // loop_exit
      _
    %782 = vsyncpa [#allocation4], 1
    %s783 = scalar_lea.sflag [#allocation4], 1
    %784 = vsyncpa %s783, 1
    %785 = vsyncpa [#allocation7], 1
    %s786 = scalar_lea.sflag [#allocation7], 1
    %787 = vsyncpa %s786, 1
    %788 = vsyncpa [#allocation5], 1
    %s789 = scalar_lea.sflag [#allocation5], 1
    %790 = vsyncpa %s789, 1

</llo_original>
